<compile_context>
chip_gen: v6e
topology: v6e:2x2x1
jax: 0.10.0
libtpu: 0.0.40
codegen_flags: <defaults>
</compile_context>

<pallas_src>
import functools
from typing import NamedTuple

import jax
import jax.numpy as jnp
from jax.experimental import pallas as pl
from jax.experimental.pallas import tpu as pltpu

_LANE = 128      # last-dim (lane) alignment
_SUBLANE = 8     # second-to-last (sublane) alignment


def _round_up(n: int, m: int) -> int:
    return ((n + m - 1) // m) * m


def _cdiv(a: int, b: int) -> int:
    return -(-a // b)


def _pad2d(a: jax.Array, rows: int, cols: int) -> jax.Array:
    r, c = a.shape
    if r == rows and c == cols:
        return a
    return jnp.pad(a, ((0, rows - r), (0, cols - c)))


@functools.lru_cache(maxsize=1)
def _device_kind() -> str:
    try:
        return jax.devices()[0].device_kind.lower()
    except Exception:
        return ""


def _vmem_budget_bytes() -> int:
    """Per-TensorCore VMEM budget we are willing to use."""
    if "v7" in _device_kind():
        return 48 * 1024 * 1024      # 64 MiB physical per TC on v7x
    return 96 * 1024 * 1024          # 128 MiB physical on v5e / v6e


def _min_grid_steps() -> int:
    """v7x has 2 TensorCores per chip; force >=2 grid steps so 'parallel' shards."""
    return 2 if "v7" in _device_kind() else 1


@functools.lru_cache(maxsize=1)
def _buffered_single_supported() -> bool:
    """Probe whether pipeline_mode=pl.Buffered(1) is accepted on this jax/TPU."""
    try:
        def _k(a_ref, o_ref):
            o_ref[...] = a_ref[...]
        x = jnp.zeros((8, 128), jnp.float32)
        pl.pallas_call(
            _k,
            out_shape=jax.ShapeDtypeStruct((8, 128), jnp.float32),
            grid=(1,),
            in_specs=[pl.BlockSpec((8, 128), lambda i: (0, 0),
                                   pipeline_mode=pl.Buffered(buffer_count=1))],
            out_specs=pl.BlockSpec((8, 128), lambda i: (0, 0)),
        )(x)
        return True
    except Exception:
        return False


class PreparedMLP(NamedTuple):
    """Padded / dtype-cast parameters, prepared once and reused every forward."""
    wb_flat: tuple      # (w0, b0, w1, b1, ...) padded; w in matmul_dtype, b in f32
    in_dim: int
    out_dim: int
    matmul_dtype: object


def prepare_mlp_params(params, *, matmul_dtype=jnp.bfloat16) -> PreparedMLP:
    """One-time prep: pad feature dims to 128 (final output dim left unpadded),
    cast weights to the matmul dtype, biases to f32."""
    n_layers = len(params)
    dims = [params[0][0].shape[0]] + [w.shape[1] for (w, _) in params]
    dims_pad = [_round_up(d, _LANE) for d in dims]
    out_dim = dims[-1]
    wb_flat = []
    for l, (w, b) in enumerate(params):
        in_pad = dims_pad[l]
        # Intermediate outputs lane-padded (zero cols -> zero activations, inert);
        # the final head keeps its natural width to avoid 16x padded HBM writes.
        o_pad = dims_pad[l + 1] if l < n_layers - 1 else out_dim
        wb_flat.append(_pad2d(w, in_pad, o_pad).astype(matmul_dtype))
        wb_flat.append(_pad2d(b.reshape(1, -1), 1, o_pad).astype(jnp.float32))
    return PreparedMLP(tuple(wb_flat), dims[0], out_dim, matmul_dtype)


def _mlp_fused_kernel(*refs, relu_flags, matmul_dtype, out_dtype):
    """h = x; for each layer: h = relu?(h @ W + b); store h.

    refs = (x_ref, w_0, b_0, ..., w_{L-1}, b_{L-1}, o_ref).
    Matmuls in `matmul_dtype` with f32 accumulation; bias/ReLU epilogue in f32.
    Intermediate activations never leave vregs/VMEM (no HBM traffic between layers).
    """
    n_layers = len(relu_flags)
    x_ref = refs[0]
    o_ref = refs[-1]
    wb = refs[1:-1]

    h = x_ref[...]
    for l in range(n_layers):
        w = wb[2 * l][...]                              # [Din_pad, Dout(_pad)]
        b = wb[2 * l + 1][...]                          # [1, Dout(_pad)] f32
        acc = jnp.dot(h.astype(matmul_dtype), w,
                      preferred_element_type=jnp.float32)
        acc = acc + b
        if relu_flags[l]:
            acc = jnp.maximum(acc, 0.0)
        h = acc
    o_ref[...] = h.astype(out_dtype)


def _run_fused(x_pad, wb_flat, relu_flags, out_dim, out_dtype, matmul_dtype,
               tm, steps, vmem_limit):
    """One pallas_call over a stack of layers: gridless if steps==1, else a 1-D
    'parallel' batch grid with the weights VMEM-resident (constant block index,
    single-buffered when supported)."""
    n_layers = len(relu_flags)
    b_rows, d_in_pad = x_pad.shape
    kernel = functools.partial(_mlp_fused_kernel, relu_flags=relu_flags,
                               matmul_dtype=matmul_dtype, out_dtype=out_dtype)

    flops = 2 * b_rows * sum(int(wb_flat[2 * l].shape[0]) * int(wb_flat[2 * l].shape[1])
                             for l in range(n_layers))
    bytes_accessed = int(x_pad.size) * x_pad.dtype.itemsize
    bytes_accessed += sum(int(a.size) * a.dtype.itemsize for a in wb_flat)
    bytes_accessed += int(b_rows) * int(out_dim) * jnp.dtype(out_dtype).itemsize
    cost = pl.CostEstimate(flops=int(flops), transcendentals=0,
                           bytes_accessed=int(bytes_accessed))
    out_shape = jax.ShapeDtypeStruct((b_rows, out_dim), out_dtype)

    if steps == 1:
        vmem = pltpu.MemorySpace.VMEM
        return pl.pallas_call(
            kernel,
            out_shape=out_shape,
            in_specs=[pl.BlockSpec(memory_space=vmem)] * (1 + 2 * n_layers),
            out_specs=pl.BlockSpec(memory_space=vmem),
            compiler_params=pltpu.CompilerParams(vmem_limit_bytes=int(vmem_limit)),
            cost_estimate=cost,
        )(x_pad, *wb_flat)

    def build(weight_mode):
        in_specs = [pl.BlockSpec((tm, d_in_pad), lambda i: (i, 0))]
        for l in range(n_layers):
            w, b = wb_flat[2 * l], wb_flat[2 * l + 1]
            # Constant block index -> weights stay resident across grid steps.
            in_specs.append(pl.BlockSpec(tuple(w.shape), lambda i: (0, 0),
                                         pipeline_mode=weight_mode))
            in_specs.append(pl.BlockSpec(tuple(b.shape), lambda i: (0, 0),
                                         pipeline_mode=weight_mode))
        return pl.pallas_call(
            kernel,
            out_shape=out_shape,
            grid=(steps,),
            in_specs=in_specs,
            out_specs=pl.BlockSpec((tm, out_dim), lambda i: (i, 0)),
            compiler_params=pltpu.CompilerParams(
                dimension_semantics=("parallel",),
                vmem_limit_bytes=int(vmem_limit)),
            cost_estimate=cost,
        )(x_pad, *wb_flat)

    if _buffered_single_supported():
        try:
            return build(pl.Buffered(buffer_count=1))   # no wasted 2nd weight buffer
        except Exception:
            pass
    return build(None)


def _choose_batch_tiling(batch, tm_cap, min_steps):
    """Pick (grid_steps, rows_per_step). rows_per_step is a sublane multiple and
    steps*rows >= batch with minimal padding (no full-tile batch padding)."""
    batch = max(int(batch), 1)
    tm_cap = max(int(tm_cap), _SUBLANE)
    if batch <= 2 * _SUBLANE:
        return 1, _round_up(batch, _SUBLANE)
    steps = max(min_steps, _cdiv(batch, tm_cap))
    tm = _round_up(_cdiv(batch, steps), _SUBLANE)
    steps = max(_cdiv(batch, tm), min_steps)
    return steps, tm


def mlp_forward(params, x, *, batch_tile=512, matmul_dtype=jnp.bfloat16):
    """Run the MLP forward. `params` is either a PreparedMLP (preferred: prepared
    once via prepare_mlp_params) or a raw list of (w [in,out], b [out]) pairs."""
    prepared = params if isinstance(params, PreparedMLP) else \
        prepare_mlp_params(params, matmul_dtype=matmul_dtype)
    wb_flat = list(prepared.wb_flat)
    n_layers = len(wb_flat) // 2
    matmul_dtype = prepared.matmul_dtype

    B, d_in = x.shape
    assert d_in == prepared.in_dim, "input feature dim mismatch"
    out_dtype = x.dtype
    d_out = prepared.out_dim
    d_in_pad = wb_flat[0].shape[0]
    dims_pad = [d_in_pad] + [wb_flat[2 * l].shape[1] for l in range(n_layers)]

    budget = _vmem_budget_bytes()
    min_steps = _min_grid_steps()
    mm_bytes = jnp.dtype(matmul_dtype).itemsize
    out_bytes = jnp.dtype(out_dtype).itemsize
    headroom = 2 << 20

    wb_bytes = sum(int(a.size) * a.dtype.itemsize for a in wb_flat)
    max_dim = max(dims_pad + [d_out])
    # Per-batch-row VMEM: double-buffered x tile + out tile + f32 live activations.
    row_bytes = 2 * d_in_pad * mm_bytes + 2 * d_out * out_bytes + 3 * max_dim * 4

    relu_flags = tuple(l < n_layers - 1 for l in range(n_layers))

    if wb_bytes + _SUBLANE * row_bytes + headroom <= budget:
        # Fast path: ALL layers' weights resident in VMEM, single fused call.
        avail = budget - wb_bytes - headroom
        tm_cap = max(_SUBLANE, min(batch_tile, (avail // row_bytes) // _SUBLANE * _SUBLANE))
        steps, tm = _choose_batch_tiling(B, tm_cap, min_steps)
        b_rows = steps * tm
        x_pad = _pad2d(x, b_rows, d_in_pad).astype(matmul_dtype)
        out_pad = _run_fused(x_pad, wb_flat, relu_flags, d_out, out_dtype,
                             matmul_dtype, tm, steps, budget)
        return out_pad[:B]

    # Fallback: weights do not all fit in VMEM -> one pallas_call per layer,
    # each layer's weights resident on their own (activations round-trip HBM
    # in the matmul dtype).
    # TODO(synk): tile over K/N inside a layer if a single layer's weights still
    #             exceed the VMEM budget (not needed for MLP-sized layers).
    h = x
    for l in range(n_layers):
        w, b = wb_flat[2 * l], wb_flat[2 * l + 1]
        last = (l == n_layers - 1)
        layer_out_dim = d_out if last else int(w.shape[1])
        layer_out_dtype = out_dtype if last else matmul_dtype
        layer_bytes = int(w.size) * w.dtype.itemsize + int(b.size) * b.dtype.itemsize
        layer_row = (2 * int(w.shape[0]) * mm_bytes
                     + 2 * layer_out_dim * jnp.dtype(layer_out_dtype).itemsize
                     + 3 * max(int(w.shape[0]), int(w.shape[1])) * 4)
        avail = max(budget - layer_bytes - headroom, _SUBLANE * layer_row)
        tm_cap = max(_SUBLANE, min(batch_tile, (avail // layer_row) // _SUBLANE * _SUBLANE))
        steps, tm = _choose_batch_tiling(B, tm_cap, min_steps)
        b_rows = steps * tm
        h_pad = _pad2d(h, b_rows, int(w.shape[0])).astype(matmul_dtype)
        h = _run_fused(h_pad, (w, b), (relu_flags[l],), layer_out_dim,
                       layer_out_dtype, matmul_dtype, tm, steps, budget)[:B]
    return h


def init_mlp_params(key, shape, input_dim, output_dim, dtype=jnp.float32):
    """Mirror nn.Linear shapes/init: weight U(-1/sqrt(in), 1/sqrt(in)),
    stored transposed as [in, out]; bias [out] with the same bound."""
    dims = [input_dim] + list(shape) + [output_dim]
    params = []
    for i in range(len(dims) - 1):
        fan_in, fan_out = dims[i], dims[i + 1]
        key, kw, kb = jax.random.split(key, 3)
        bound = 1.0 / jnp.sqrt(jnp.asarray(fan_in, dtype))
        w = jax.random.uniform(kw, (fan_in, fan_out), dtype, -bound, bound)
        b = jax.random.uniform(kb, (fan_out,), dtype, -bound, bound)
        params.append((w, b))
    return params


def mlp_reference(params, x):
    """Plain-JAX reference matching the PyTorch forward."""
    h = x
    n = len(params)
    for i, (w, b) in enumerate(params):
        h = h @ w + b
        if i < n - 1:
            h = jnp.maximum(h, 0.0)
    return h


if __name__ == "__main__":
    key = jax.random.PRNGKey(0)

    # Config consistent with MLP(shape=(32, 32), input_dim=16, output_dim=8)
    batch = 8
    input_dim = 16
    hidden_shape = (32, 32)
    output_dim = 8

    key, kx = jax.random.split(key)
    x = jax.random.normal(kx, (batch, input_dim), dtype=jnp.float32)
    params = init_mlp_params(key, hidden_shape, input_dim, output_dim)
    ref = mlp_reference(params, x)

    # Weights are padded / cast ONCE and reused across every forward call.
    prep_f32 = prepare_mlp_params(params, matmul_dtype=jnp.float32)
    prep_bf16 = prepare_mlp_params(params, matmul_dtype=jnp.bfloat16)

    # 1) f32-matmul path: tight check of the fusion + padding logic.
    out_f32 = jax.block_until_ready(mlp_forward(prep_f32, x))
    assert out_f32.shape == (batch, output_dim)
    assert jnp.allclose(out_f32, ref, atol=1e-4, rtol=1e-4)

    # 2) Default bf16-on-MXU path (f32 accumulation): looser tolerance.
    out_bf16 = jax.block_until_ready(mlp_forward(prep_bf16, x))
    assert out_bf16.shape == (batch, output_dim)
    assert jnp.allclose(out_bf16, ref, atol=5e-2, rtol=5e-2)

    # 3) Larger batch exercises the tiled "parallel" batch-grid path
    #    (adaptive tile: 600 rows pad to 608, not 768).
    key, kx2 = jax.random.split(key)
    x_big = jax.random.normal(kx2, (600, input_dim), dtype=jnp.float32)
    ref_big = mlp_reference(params, x_big)
    out_big = jax.block_until_ready(mlp_forward(prep_bf16, x_big))
    assert out_big.shape == (600, output_dim)
    assert jnp.allclose(out_big, ref_big, atol=5e-2, rtol=5e-2)

    print("KERNEL_OK")
</pallas_src>

<mosaic_0001>
module attributes {stable_mosaic.version = 11 : i64} {
  func.func @_mlp_fused_kernel(%arg0: memref<8x128xf32, #tpu.memory_space<vmem>>, %arg1: memref<128x128xf32, #tpu.memory_space<vmem>>, %arg2: memref<1x128xf32, #tpu.memory_space<vmem>>, %arg3: memref<128x128xf32, #tpu.memory_space<vmem>>, %arg4: memref<1x128xf32, #tpu.memory_space<vmem>>, %arg5: memref<128x8xf32, #tpu.memory_space<vmem>>, %arg6: memref<1x8xf32, #tpu.memory_space<vmem>>, %arg7: memref<8x8xf32, #tpu.memory_space<vmem>>) attributes {dimension_semantics = [], scalar_prefetch = 0 : i64, scratch_operands = 0 : i64, tpu.core_type = #tpu.core_type<tc>} {
    %c0 = arith.constant 0 : index
    %c0_0 = arith.constant 0 : index
    %0 = vector.load %arg0[%c0, %c0_0] : memref<8x128xf32, #tpu.memory_space<vmem>>, vector<8x128xf32>
    %c0_1 = arith.constant 0 : index
    %c0_2 = arith.constant 0 : index
    %1 = vector.load %arg1[%c0_1, %c0_2] : memref<128x128xf32, #tpu.memory_space<vmem>>, vector<128x128xf32>
    %c0_3 = arith.constant 0 : index
    %c0_4 = arith.constant 0 : index
    %2 = vector.load %arg2[%c0_3, %c0_4] : memref<1x128xf32, #tpu.memory_space<vmem>>, vector<1x128xf32>
    %cst = arith.constant dense<0.000000e+00> : vector<8x128xf32>
    %3 = tpu.matmul %0, %1, %cst {dimension_numbers = #tpu.dot_dimension_numbers<[1], [0], [0], [1], [0, 0, 1, 1], [], []>} : vector<8x128xf32>, vector<128x128xf32>, vector<8x128xf32> -> vector<8x128xf32>
    %4 = vector.broadcast %2 : vector<1x128xf32> to vector<8x128xf32>
    %5 = arith.addf %3, %4 : vector<8x128xf32>
    %cst_5 = arith.constant 0.000000e+00 : f32
    %6 = vector.broadcast %cst_5 : f32 to vector<8x128xf32>
    %7 = arith.maximumf %5, %6 : vector<8x128xf32>
    %c0_6 = arith.constant 0 : index
    %c0_7 = arith.constant 0 : index
    %8 = vector.load %arg3[%c0_6, %c0_7] : memref<128x128xf32, #tpu.memory_space<vmem>>, vector<128x128xf32>
    %c0_8 = arith.constant 0 : index
    %c0_9 = arith.constant 0 : index
    %9 = vector.load %arg4[%c0_8, %c0_9] : memref<1x128xf32, #tpu.memory_space<vmem>>, vector<1x128xf32>
    %cst_10 = arith.constant dense<0.000000e+00> : vector<8x128xf32>
    %10 = tpu.matmul %7, %8, %cst_10 {dimension_numbers = #tpu.dot_dimension_numbers<[1], [0], [0], [1], [0, 0, 1, 1], [], []>} : vector<8x128xf32>, vector<128x128xf32>, vector<8x128xf32> -> vector<8x128xf32>
    %11 = vector.broadcast %9 : vector<1x128xf32> to vector<8x128xf32>
    %12 = arith.addf %10, %11 : vector<8x128xf32>
    %cst_11 = arith.constant 0.000000e+00 : f32
    %13 = vector.broadcast %cst_11 : f32 to vector<8x128xf32>
    %14 = arith.maximumf %12, %13 : vector<8x128xf32>
    %c0_12 = arith.constant 0 : index
    %c0_13 = arith.constant 0 : index
    %15 = vector.load %arg5[%c0_12, %c0_13] : memref<128x8xf32, #tpu.memory_space<vmem>>, vector<128x8xf32>
    %c0_14 = arith.constant 0 : index
    %c0_15 = arith.constant 0 : index
    %16 = vector.load %arg6[%c0_14, %c0_15] : memref<1x8xf32, #tpu.memory_space<vmem>>, vector<1x8xf32>
    %cst_16 = arith.constant dense<0.000000e+00> : vector<8x8xf32>
    %17 = tpu.matmul %14, %15, %cst_16 {dimension_numbers = #tpu.dot_dimension_numbers<[1], [0], [0], [1], [0, 0, 1, 1], [], []>} : vector<8x128xf32>, vector<128x8xf32>, vector<8x8xf32> -> vector<8x8xf32>
    %18 = vector.broadcast %16 : vector<1x8xf32> to vector<8x8xf32>
    %19 = arith.addf %17, %18 : vector<8x8xf32>
    %c0_17 = arith.constant 0 : index
    %c0_18 = arith.constant 0 : index
    %20 = vector.load %arg7[%c0_17, %c0_18] : memref<8x8xf32, #tpu.memory_space<vmem>>, vector<8x8xf32>
    tpu.vector_store %arg7[%c0_17, %c0_18], %19 {strides = array<i32>} : memref<8x8xf32, #tpu.memory_space<vmem>>, vector<8x8xf32>,
    return
  }
}

</mosaic_0001>

<llo_original>
// kernel: tpu_custom_call.1
$region0: #{tpu_custom_call.1}
  #allocation0 [shape = 'u32[]', space=smem, size = 0x4, offset = 0x4, fixed_abs, tag = 'smem constant byte address 0x4 - core index']
  #allocation1 [shape = 'u32[144,128]{1,0:T(1,128)}', space=vmem, size = 0x12000, scoped, tag = 'internal scratch']
  %s0 = inlined_call_operand.vmem [shape: f32[8,128], index: 0, kind: input, shape index: {}]
  %s1 = inlined_call_operand.vmem [shape: f32[128,128], index: 1, kind: input, shape index: {}]
  %s2 = inlined_call_operand.vmem [shape: f32[1,128], index: 2, kind: input, shape index: {}]
  %s3 = inlined_call_operand.hbm [shape: f32[128,128], index: 3, kind: input, shape index: {}]
  %s4 = inlined_call_operand.hbm [shape: f32[1,128], index: 4, kind: input, shape index: {}]
  %s5 = inlined_call_operand.vmem [shape: f32[128,8], index: 5, kind: input, shape index: {}]
  %s6 = inlined_call_operand.vmem [shape: f32[1,8], index: 6, kind: input, shape index: {}]
  %s7 = inlined_call_operand.hbm [shape: f32[8,8], index: 7, kind: output, shape index: {}]
  %s8 = sld [smem:[#allocation0]]
  $region46: #{tpu_custom_call.1} parent=0
    _
  %s10 = ssub.s32 1, %s8
  %s11 = scalar_select 0, %s10, %s8
  $region1: #{tpu_custom_call.1} parent=0
    #allocation2 [shape = 'u8[65536]{0}', space=vmem, size = 0x10000, scoped, tag = 'input window, operand 3, single buffered']
    #allocation3 [shape = 's32[1]{0}', space=sflag, size = 0x4, scoped, tag = 'scoped memory for tpu_custom_call.1']
    #allocation4 [shape = 's32[1]{0}', space=sflag, size = 0x4, scoped, tag = 'scoped memory for tpu_custom_call.1']
    #allocation5 [shape = 'u8[512]{0}', space=vmem, size = 0x400, scoped, tag = 'input window, operand 4, single buffered']
    #allocation6 [shape = 's32[1]{0}', space=sflag, size = 0x4, scoped, tag = 'scoped memory for tpu_custom_call.1']
    #allocation7 [shape = 'u8[4096]{0}', space=vmem, size = 0x1000, scoped, tag = 'output window, operand 0, single buffered']
    %12 = vsyncpa [#allocation3], 0
    %13 = vsyncpa [#allocation6], 0
    %14 = vsyncpa [#allocation4], 0
    // Predicated region
    $region2: #{tpu_custom_call.1} parent=1 // pred_check
      _
    $region3: #{tpu_custom_call.1} parent=1 // pred_check_branch
      %16 = sbr.rel (0) target = $region5
    $region4: #{tpu_custom_call.1} parent=1 // pred_region
      _
    $region5: #{tpu_custom_call.1} parent=1 // pred_fallthru
      _
    // Predicated region
    $region6: #{tpu_custom_call.1} parent=1 // pred_check
      _
    $region7: #{tpu_custom_call.1} parent=1 // pred_check_branch
      %18 = sbr.rel (0) target = $region9
    $region8: #{tpu_custom_call.1} parent=1 // pred_region
      _
    $region9: #{tpu_custom_call.1} parent=1 // pred_fallthru
      _
    // Predicated region
    $region10: #{tpu_custom_call.1} parent=1 // pred_check
      _
    $region11: #{tpu_custom_call.1} parent=1 // pred_check_branch
      %20 = sbr.rel (0) target = $region13
    $region12: #{tpu_custom_call.1} parent=1 // pred_region
      _
    $region13: #{tpu_custom_call.1} parent=1 // pred_fallthru
      _
    // Predicated region
    $region14: #{tpu_custom_call.1} parent=1 // pred_check
      _
    $region15: #{tpu_custom_call.1} parent=1 // pred_check_branch
      %22 = sbr.rel (0) target = $region17
    $region16: #{tpu_custom_call.1} parent=1 // pred_region
      %s24 = ssub.s32 2048, 2048
      %25 = vsyncadd [#allocation3], %s24
      %s26 = sshll.u32 [#allocation2], 4
      %s27 = int_to_ptr.vmem [resolvable:$true] %s26
      %32 = dma.hbm_to_vmem [thread:$0]  %s3, 2048, %s27, [#allocation3], 128, 128, 8
    $region17: #{tpu_custom_call.1} parent=1 // pred_fallthru
      _
    // Predicated region
    $region18: #{tpu_custom_call.1} parent=1 // pred_check
      _
    $region19: #{tpu_custom_call.1} parent=1 // pred_check_branch
      %34 = sbr.rel (0) target = $region21
    $region20: #{tpu_custom_call.1} parent=1 // pred_region
      %s36 = ssub.s32 16, 16
      %37 = vsyncadd [#allocation6], %s36
      %s39 = sshll.u32 [#allocation5], 4
      %s40 = int_to_ptr.vmem [resolvable:$true] %s39
      %42 = dma.hbm_to_vmem [thread:$0]  %s4, 16, %s40, [#allocation6]
    $region21: #{tpu_custom_call.1} parent=1 // pred_fallthru
      _
    // Predicated region
    $region22: #{tpu_custom_call.1} parent=1 // pred_check
      _
    $region23: #{tpu_custom_call.1} parent=1 // pred_check_branch
      %44 = sbr.rel (0) target = $region25
    $region24: #{tpu_custom_call.1} parent=1 // pred_region
      _
    $region25: #{tpu_custom_call.1} parent=1 // pred_fallthru
      _
    // Predicated region
    $region26: #{tpu_custom_call.1} parent=1 // pred_check
      _
    $region27: #{tpu_custom_call.1} parent=1 // pred_check_branch
      %46 = sbr.rel (0) target = $region29
    $region28: #{tpu_custom_call.1} parent=1 // pred_region
      _
    $region29: #{tpu_custom_call.1} parent=1 // pred_fallthru
      _
    // Predicated region
    $region30: #{tpu_custom_call.1} parent=1 // pred_check
      _
    $region31: #{tpu_custom_call.1} parent=1 // pred_check_branch
      %48 = sbr.rel (0) target = $region33
    $region32: #{tpu_custom_call.1} parent=1 // pred_region
      %49 = dma.done [#allocation3], 2048
    $region33: #{tpu_custom_call.1} parent=1 // pred_fallthru
      _
    // Predicated region
    $region34: #{tpu_custom_call.1} parent=1 // pred_check
      _
    $region35: #{tpu_custom_call.1} parent=1 // pred_check_branch
      %51 = sbr.rel (0) target = $region37
    $region36: #{tpu_custom_call.1} parent=1 // pred_region
      %52 = dma.done [#allocation6], 16
    $region37: #{tpu_custom_call.1} parent=1 // pred_fallthru
      _
    %v53 = vld [vmem:[%s0] sm:$0xff]
    %v54 = vld [vmem:[%s1] sm:$0xff]
    %v55 = vld [vmem:[%s1 + $0x8] sm:$0xff]
    %v56 = vld [vmem:[%s1 + $0x10] sm:$0xff]
    %v57 = vld [vmem:[%s1 + $0x18] sm:$0xff]
    %v58 = vld [vmem:[%s1 + $0x20] sm:$0xff]
    %v59 = vld [vmem:[%s1 + $0x28] sm:$0xff]
    %v60 = vld [vmem:[%s1 + $0x30] sm:$0xff]
    %v61 = vld [vmem:[%s1 + $0x38] sm:$0xff]
    %v62 = vld [vmem:[%s1 + $0x40] sm:$0xff]
    %v63 = vld [vmem:[%s1 + $0x48] sm:$0xff]
    %v64 = vld [vmem:[%s1 + $0x50] sm:$0xff]
    %v65 = vld [vmem:[%s1 + $0x58] sm:$0xff]
    %v66 = vld [vmem:[%s1 + $0x60] sm:$0xff]
    %v67 = vld [vmem:[%s1 + $0x68] sm:$0xff]
    %v68 = vld [vmem:[%s1 + $0x70] sm:$0xff]
    %v69 = vld [vmem:[%s1 + $0x78] sm:$0xff]
    %v70 = vld [vmem:[%s2] sm:$0x1]
    %v72 = vlaneseq
    %v73 = vshrl.u32 %v72, 7
    %v74 = vsub.s32 0, %v73
    %v75 = vrot.slane %v70, %v74
    %77 = vmatprep.subr.mxu0 0.0
    %78 = vmatpush1.msra.mxu0 %v69
    %79 = vmatprep.subr.mxu0 0.0
    %80 = vmatpush1.msra.mxu0 %v68
    %81 = vmatprep.subr.mxu0 0.0
    %82 = vmatpush1.msra.mxu0 %v67
    %83 = vmatprep.subr.mxu0 0.0
    %84 = vmatpush1.msra.mxu0 %v66
    %85 = vmatprep.subr.mxu0 0.0
    %86 = vmatpush1.msra.mxu0 %v65
    %87 = vmatprep.subr.mxu0 0.0
    %88 = vmatpush1.msra.mxu0 %v64
    %89 = vmatprep.subr.mxu0 0.0
    %90 = vmatpush1.msra.mxu0 %v63
    %91 = vmatprep.subr.mxu0 0.0
    %92 = vmatpush1.msra.mxu0 %v62
    %93 = vmatprep.subr.mxu0 0.0
    %94 = vmatpush1.msra.mxu0 %v61
    %95 = vmatprep.subr.mxu0 0.0
    %96 = vmatpush1.msra.mxu0 %v60
    %97 = vmatprep.subr.mxu0 0.0
    %98 = vmatpush1.msra.mxu0 %v59
    %99 = vmatprep.subr.mxu0 0.0
    %100 = vmatpush1.msra.mxu0 %v58
    %101 = vmatprep.subr.mxu0 0.0
    %102 = vmatpush1.msra.mxu0 %v57
    %103 = vmatprep.subr.mxu0 0.0
    %104 = vmatpush1.msra.mxu0 %v56
    %105 = vmatprep.subr.mxu0 0.0
    %106 = vmatpush1.msra.mxu0 %v55
    %107 = vmatprep.subr.mxu0 0.0
    %108 = vmatpush1.msra.mxu0 %v54
    %109 = vmatprep.subr.mxu0 0.0
    %110 = vmatpush2.msra.mxu0 0.0
    %111 = vmatprep.subr.mxu0 0.0
    %112 = vmatpush2.msra.mxu0 0.0
    %113 = vmatprep.subr.mxu0 0.0
    %114 = vmatpush2.msra.mxu0 0.0
    %115 = vmatprep.subr.mxu0 0.0
    %116 = vmatpush2.msra.mxu0 0.0
    %117 = vmatprep.subr.mxu0 0.0
    %118 = vmatpush2.msra.mxu0 0.0
    %119 = vmatprep.subr.mxu0 0.0
    %120 = vmatpush2.msra.mxu0 0.0
    %121 = vmatprep.subr.mxu0 0.0
    %122 = vmatpush2.msra.mxu0 0.0
    %123 = vmatprep.subr.mxu0 0.0
    %124 = vmatpush2.msra.mxu0 0.0
    %125 = vmatprep.subr.mxu0 0.0
    %126 = vmatpush2.msra.mxu0 0.0
    %127 = vmatprep.subr.mxu0 0.0
    %128 = vmatpush2.msra.mxu0 0.0
    %129 = vmatprep.subr.mxu0 0.0
    %130 = vmatpush2.msra.mxu0 0.0
    %131 = vmatprep.subr.mxu0 0.0
    %132 = vmatpush2.msra.mxu0 0.0
    %133 = vmatprep.subr.mxu0 0.0
    %134 = vmatpush2.msra.mxu0 0.0
    %135 = vmatprep.subr.mxu0 0.0
    %136 = vmatpush2.msra.mxu0 0.0
    %137 = vmatprep.subr.mxu0 0.0
    %138 = vmatpush2.msra.mxu0 0.0
    %139 = vmatprep.subr.mxu0 0.0
    %140 = vmatpush2.msra.mxu0 0.0
    %141 = vmatprep.mubr.f32.mxu0 0.0
    %142 = vmatmul.mubr.f32.gmra.mxu0 %v53
    %v143 = vpop.f32.mrf.mxu0
    %v144 = vadd.f32 %v75, %v143
    %v145 = vpop.f32.mrf.mxu0
    %146 = vdwg.mxu0
    %v147 = vmax.f32 %v144, 0.0
    %v148 = vld [vmem:[#allocation2] sm:$0xff]
    %v149 = vld [vmem:[#allocation2 + $0x8] sm:$0xff]
    %v150 = vld [vmem:[#allocation2 + $0x10] sm:$0xff]
    %v151 = vld [vmem:[#allocation2 + $0x18] sm:$0xff]
    %v152 = vld [vmem:[#allocation2 + $0x20] sm:$0xff]
    %v153 = vld [vmem:[#allocation2 + $0x28] sm:$0xff]
    %v154 = vld [vmem:[#allocation2 + $0x30] sm:$0xff]
    %v155 = vld [vmem:[#allocation2 + $0x38] sm:$0xff]
    %v156 = vld [vmem:[#allocation2 + $0x40] sm:$0xff]
    %v157 = vld [vmem:[#allocation2 + $0x48] sm:$0xff]
    %v158 = vld [vmem:[#allocation2 + $0x50] sm:$0xff]
    %v159 = vld [vmem:[#allocation2 + $0x58] sm:$0xff]
    %v160 = vld [vmem:[#allocation2 + $0x60] sm:$0xff]
    %v161 = vld [vmem:[#allocation2 + $0x68] sm:$0xff]
    %v162 = vld [vmem:[#allocation2 + $0x70] sm:$0xff]
    %v163 = vld [vmem:[#allocation2 + $0x78] sm:$0xff]
    %v164 = vld [vmem:[#allocation5] sm:$0x1]
    %v166 = vlaneseq
    %v167 = vshrl.u32 %v166, 7
    %v168 = vsub.s32 0, %v167
    %v169 = vrot.slane %v164, %v168
    %171 = vmatprep.subr.mxu0 0.0
    %172 = vmatpush1.msra.mxu0 %v163
    %173 = vmatprep.subr.mxu0 0.0
    %174 = vmatpush1.msra.mxu0 %v162
    %175 = vmatprep.subr.mxu0 0.0
    %176 = vmatpush1.msra.mxu0 %v161
    %177 = vmatprep.subr.mxu0 0.0
    %178 = vmatpush1.msra.mxu0 %v160
    %179 = vmatprep.subr.mxu0 0.0
    %180 = vmatpush1.msra.mxu0 %v159
    %181 = vmatprep.subr.mxu0 0.0
    %182 = vmatpush1.msra.mxu0 %v158
    %183 = vmatprep.subr.mxu0 0.0
    %184 = vmatpush1.msra.mxu0 %v157
    %185 = vmatprep.subr.mxu0 0.0
    %186 = vmatpush1.msra.mxu0 %v156
    %187 = vmatprep.subr.mxu0 0.0
    %188 = vmatpush1.msra.mxu0 %v155
    %189 = vmatprep.subr.mxu0 0.0
    %190 = vmatpush1.msra.mxu0 %v154
    %191 = vmatprep.subr.mxu0 0.0
    %192 = vmatpush1.msra.mxu0 %v153
    %193 = vmatprep.subr.mxu0 0.0
    %194 = vmatpush1.msra.mxu0 %v152
    %195 = vmatprep.subr.mxu0 0.0
    %196 = vmatpush1.msra.mxu0 %v151
    %197 = vmatprep.subr.mxu0 0.0
    %198 = vmatpush1.msra.mxu0 %v150
    %199 = vmatprep.subr.mxu0 0.0
    %200 = vmatpush1.msra.mxu0 %v149
    %201 = vmatprep.subr.mxu0 0.0
    %202 = vmatpush1.msra.mxu0 %v148
    %203 = vmatprep.subr.mxu0 0.0
    %204 = vmatpush2.msra.mxu0 0.0
    %205 = vmatprep.subr.mxu0 0.0
    %206 = vmatpush2.msra.mxu0 0.0
    %207 = vmatprep.subr.mxu0 0.0
    %208 = vmatpush2.msra.mxu0 0.0
    %209 = vmatprep.subr.mxu0 0.0
    %210 = vmatpush2.msra.mxu0 0.0
    %211 = vmatprep.subr.mxu0 0.0
    %212 = vmatpush2.msra.mxu0 0.0
    %213 = vmatprep.subr.mxu0 0.0
    %214 = vmatpush2.msra.mxu0 0.0
    %215 = vmatprep.subr.mxu0 0.0
    %216 = vmatpush2.msra.mxu0 0.0
    %217 = vmatprep.subr.mxu0 0.0
    %218 = vmatpush2.msra.mxu0 0.0
    %219 = vmatprep.subr.mxu0 0.0
    %220 = vmatpush2.msra.mxu0 0.0
    %221 = vmatprep.subr.mxu0 0.0
    %222 = vmatpush2.msra.mxu0 0.0
    %223 = vmatprep.subr.mxu0 0.0
    %224 = vmatpush2.msra.mxu0 0.0
    %225 = vmatprep.subr.mxu0 0.0
    %226 = vmatpush2.msra.mxu0 0.0
    %227 = vmatprep.subr.mxu0 0.0
    %228 = vmatpush2.msra.mxu0 0.0
    %229 = vmatprep.subr.mxu0 0.0
    %230 = vmatpush2.msra.mxu0 0.0
    %231 = vmatprep.subr.mxu0 0.0
    %232 = vmatpush2.msra.mxu0 0.0
    %233 = vmatprep.subr.mxu0 0.0
    %234 = vmatpush2.msra.mxu0 0.0
    %235 = vmatprep.mubr.f32.mxu0 0.0
    %236 = vmatmul.mubr.f32.gmra.mxu0 %v147
    %v237 = vpop.f32.mrf.mxu0
    %v238 = vadd.f32 %v169, %v237
    %v239 = vpop.f32.mrf.mxu0
    %240 = vdwg.mxu0
    %v241 = vmax.f32 %v238, 0.0
    %v242 = vld [vmem:[%s5] sm:$0xff]
    %v243 = vld [vmem:[%s5 + $0x8] sm:$0xff]
    %v244 = vld [vmem:[%s5 + $0x10] sm:$0xff]
    %v245 = vld [vmem:[%s5 + $0x18] sm:$0xff]
    %v246 = vld [vmem:[%s5 + $0x20] sm:$0xff]
    %v247 = vld [vmem:[%s5 + $0x28] sm:$0xff]
    %v248 = vld [vmem:[%s5 + $0x30] sm:$0xff]
    %v249 = vld [vmem:[%s5 + $0x38] sm:$0xff]
    %v250 = vld [vmem:[%s5 + $0x40] sm:$0xff]
    %v251 = vld [vmem:[%s5 + $0x48] sm:$0xff]
    %v252 = vld [vmem:[%s5 + $0x50] sm:$0xff]
    %v253 = vld [vmem:[%s5 + $0x58] sm:$0xff]
    %v254 = vld [vmem:[%s5 + $0x60] sm:$0xff]
    %v255 = vld [vmem:[%s5 + $0x68] sm:$0xff]
    %v256 = vld [vmem:[%s5 + $0x70] sm:$0xff]
    %v257 = vld [vmem:[%s5 + $0x78] sm:$0xff]
    %v258 = vld [vmem:[%s6] sm:$0x1]
    %v260 = vlaneseq
    %v261 = vshrl.u32 %v260, 7
    %v262 = vsub.s32 0, %v261
    %v263 = vrot.slane %v258, %v262
    %265 = vmatprep.subr.mxu0 0.0
    %266 = vmatpush1.msra.mxu0 %v257
    %267 = vmatprep.subr.mxu0 0.0
    %268 = vmatpush1.msra.mxu0 %v256
    %269 = vmatprep.subr.mxu0 0.0
    %270 = vmatpush1.msra.mxu0 %v255
    %271 = vmatprep.subr.mxu0 0.0
    %272 = vmatpush1.msra.mxu0 %v254
    %273 = vmatprep.subr.mxu0 0.0
    %274 = vmatpush1.msra.mxu0 %v253
    %275 = vmatprep.subr.mxu0 0.0
    %276 = vmatpush1.msra.mxu0 %v252
    %277 = vmatprep.subr.mxu0 0.0
    %278 = vmatpush1.msra.mxu0 %v251
    %279 = vmatprep.subr.mxu0 0.0
    %280 = vmatpush1.msra.mxu0 %v250
    %281 = vmatprep.subr.mxu0 0.0
    %282 = vmatpush1.msra.mxu0 %v249
    %283 = vmatprep.subr.mxu0 0.0
    %284 = vmatpush1.msra.mxu0 %v248
    %285 = vmatprep.subr.mxu0 0.0
    %286 = vmatpush1.msra.mxu0 %v247
    %287 = vmatprep.subr.mxu0 0.0
    %288 = vmatpush1.msra.mxu0 %v246
    %289 = vmatprep.subr.mxu0 0.0
    %290 = vmatpush1.msra.mxu0 %v245
    %291 = vmatprep.subr.mxu0 0.0
    %292 = vmatpush1.msra.mxu0 %v244
    %293 = vmatprep.subr.mxu0 0.0
    %294 = vmatpush1.msra.mxu0 %v243
    %295 = vmatprep.subr.mxu0 0.0
    %296 = vmatpush1.msra.mxu0 %v242
    %297 = vmatprep.subr.mxu0 0.0
    %298 = vmatpush2.msra.mxu0 0.0
    %299 = vmatprep.subr.mxu0 0.0
    %300 = vmatpush2.msra.mxu0 0.0
    %301 = vmatprep.subr.mxu0 0.0
    %302 = vmatpush2.msra.mxu0 0.0
    %303 = vmatprep.subr.mxu0 0.0
    %304 = vmatpush2.msra.mxu0 0.0
    %305 = vmatprep.subr.mxu0 0.0
    %306 = vmatpush2.msra.mxu0 0.0
    %307 = vmatprep.subr.mxu0 0.0
    %308 = vmatpush2.msra.mxu0 0.0
    %309 = vmatprep.subr.mxu0 0.0
    %310 = vmatpush2.msra.mxu0 0.0
    %311 = vmatprep.subr.mxu0 0.0
    %312 = vmatpush2.msra.mxu0 0.0
    %313 = vmatprep.subr.mxu0 0.0
    %314 = vmatpush2.msra.mxu0 0.0
    %315 = vmatprep.subr.mxu0 0.0
    %316 = vmatpush2.msra.mxu0 0.0
    %317 = vmatprep.subr.mxu0 0.0
    %318 = vmatpush2.msra.mxu0 0.0
    %319 = vmatprep.subr.mxu0 0.0
    %320 = vmatpush2.msra.mxu0 0.0
    %321 = vmatprep.subr.mxu0 0.0
    %322 = vmatpush2.msra.mxu0 0.0
    %323 = vmatprep.subr.mxu0 0.0
    %324 = vmatpush2.msra.mxu0 0.0
    %325 = vmatprep.subr.mxu0 0.0
    %326 = vmatpush2.msra.mxu0 0.0
    %327 = vmatprep.subr.mxu0 0.0
    %328 = vmatpush2.msra.mxu0 0.0
    %329 = vmatprep.mubr.f32.mxu0 0.0
    %330 = vmatmul.mubr.f32.gmra.mxu0 %v241
    %v331 = vpop.f32.mrf.mxu0
    %v332 = vadd.f32 %v263, %v331
    %v333 = vpop.f32.mrf.mxu0
    %334 = vdwg.mxu0
    %vm335 = vcmask 64512
    %336 = vst.msk [vmem:[#allocation7] sm:$0xff] %vm335, %v332
    // Predicated region
    $region38: #{tpu_custom_call.1} parent=1 // pred_check
      _
    $region39: #{tpu_custom_call.1} parent=1 // pred_check_branch
      %338 = sbr.rel (0) target = $region41
    $region40: #{tpu_custom_call.1} parent=1 // pred_region
      %s340 = ssub.s32 128, 128
      %341 = vsyncadd [#allocation4], %s340
      %s343 = sshll.u32 [#allocation7], 4
      %s344 = int_to_ptr.vmem [resolvable:$true] %s343
      %346 = dma.vmem_to_hbm [thread:$0]  %s344, 128, %s7, [#allocation4]
    $region41: #{tpu_custom_call.1} parent=1 // pred_fallthru
      _
    // Predicated region
    $region42: #{tpu_custom_call.1} parent=1 // pred_check
      _
    $region43: #{tpu_custom_call.1} parent=1 // pred_check_branch
      %348 = sbr.rel (0) target = $region45
    $region44: #{tpu_custom_call.1} parent=1 // pred_region
      %349 = dma.done [#allocation4], 128
    $region45: #{tpu_custom_call.1} parent=1 // pred_fallthru
      _
    %350 = vsyncpa [#allocation3], 1
    %351 = vsyncpa [#allocation6], 1
    %352 = vsyncpa [#allocation4], 1

</llo_original>
